<compile_context>
chip_gen: v7x
topology: tpu7x:2x2x1
jax: 0.10.0
libtpu: 0.0.40
codegen_flags: <defaults>
</compile_context>

<pallas_src>
from functools import partial

import jax
import jax.numpy as jnp
from jax import lax
from jax.experimental import pallas as pl
from jax.experimental.pallas import tpu as pltpu

_LANES = 128  # batch rows packed onto the lane axis


def _test_module_kernel(x_ref, w_ref, b_ref, y_ref, pred_ref, part_ref, *, batch):
    """One tile of fused Linear(10,1) + BCEWithLogitsLoss partial sum.

    x_ref:    (TR, 128*D) f32  packed float_features (128 batch rows per sublane row)
    w_ref:    (128*D, 128) f32 block-diagonal weights (resident)
    b_ref:    (1,)        f32  Linear bias (SMEM)
    y_ref:    (TR, 128)   f32  packed labels
    pred_ref: (TR, 128)   f32  packed logits (lane-dense stores)
    part_ref: (1, 1, 128) f32  per-tile lane partial of the loss sum
    """
    i = pl.program_id(0)
    tile_rows, lanes = pred_ref.shape

    # Linear(10, 1) over 128 packed batch columns: one small MXU matmul.
    z = jnp.dot(x_ref[...], w_ref[...], preferred_element_type=jnp.float32)
    z = z + b_ref[0]                                          # (TR, 128)
    pred_ref[...] = z.astype(pred_ref.dtype)

    # Numerically stable BCE-with-logits, fully lane-dense on the VPU/EUP:
    #   l = max(z, 0) - z*y + log(1 + exp(-|z|))
    y = y_ref[...]
    per = jnp.maximum(z, 0.0) - z * y + jnp.log(1.0 + jnp.exp(-jnp.abs(z)))

    # Mask padded / out-of-range batch elements out of the loss sum.
    row = lax.broadcasted_iota(jnp.int32, (tile_rows, lanes), 0)
    col = lax.broadcasted_iota(jnp.int32, (tile_rows, lanes), 1)
    idx = (i * tile_rows + row) * lanes + col
    per = jnp.where(idx < batch, per, 0.0)

    # Per-tile lane partial; no carried state (grid axis stays "parallel"),
    # final cross-tile reduction happens in the wrapper.
    part_ref[0] = jnp.sum(per, axis=0, keepdims=True)


def _forward_jnp(x, weight, bias, label):
    """Plain-XLA fast path / reference: exact-f32 Linear + stable BCE."""
    z = jnp.sum(x * weight.reshape(1, -1), axis=1, keepdims=True) + bias.reshape(1, 1)
    loss = jnp.mean(jnp.maximum(z, 0.0) - z * label
                    + jnp.log(1.0 + jnp.exp(-jnp.abs(z))))
    return loss, z


def test_module_forward(x, weight, bias, label, *, tile_rows=128,
                        min_pallas_batch=4096, force_pallas=False):
    """Fused Linear(10,1) + BCEWithLogitsLoss forward.

    Args:
      x:      (B, 10) float32 float_features
      weight: (1, 10) float32 nn.Linear weight
      bias:   (1,)    float32 nn.Linear bias
      label:  (B, 1)  float32 targets in [0, 1]
      tile_rows: packed rows (of 128 batch elems each) per grid step; 128 -> 16K
        batch rows / step.  Must be a multiple of 8.
    Returns:
      (loss, pred): scalar float32, (B, 1) float32
    """
    x = jnp.asarray(x, jnp.float32)
    weight = jnp.asarray(weight, jnp.float32)
    bias = jnp.asarray(bias, jnp.float32)
    label = jnp.asarray(label, jnp.float32)

    B, D = x.shape
    if B < min_pallas_batch and not force_pallas:
        # Small-batch fast path: one fused XLA expression beats kernel overhead.
        return _forward_jnp(x, weight, bias, label)

    assert tile_rows % 8 == 0, "tile_rows must be a multiple of 8"

    # Pad the batch up to a multiple of 128 lanes (copy only when needed).
    Bp = ((B + _LANES - 1) // _LANES) * _LANES
    if Bp != B:
        x = jnp.pad(x, ((0, Bp - B), (0, 0)))
        label = jnp.pad(label, ((0, Bp - B), (0, 0)))
    rows = Bp // _LANES

    # Row-major repack (no transpose): 128 consecutive batch rows per packed row.
    xp = x.reshape(rows, _LANES * D)         # (rows, 1280)
    yp = label.reshape(rows, _LANES)         # (rows, 128)

    tbr = rows if rows <= tile_rows else tile_rows
    n_tiles = pl.cdiv(rows, tbr)

    # Block-diagonal weights: w_blk[g*D + d, g] = w[d]; built once, ~640 KiB.
    eye = jnp.eye(_LANES, dtype=jnp.float32)
    w_blk = (eye[:, None, :] * weight.reshape(1, D, 1)).reshape(_LANES * D, _LANES)
    b_s = bias.reshape(1)

    kernel = partial(_test_module_kernel, batch=B)

    cost = pl.CostEstimate(
        flops=2 * rows * (_LANES * D) * _LANES + 10 * Bp,
        transcendentals=2 * Bp,
        bytes_accessed=4 * (rows * _LANES * D      # x (packed)
                            + 2 * rows * _LANES    # label + pred
                            + _LANES * D * _LANES  # block-diag weights
                            + n_tiles * _LANES + 1),
    )

    pred_packed, partials = pl.pallas_call(
        kernel,
        out_shape=(
            jax.ShapeDtypeStruct((rows, _LANES), jnp.float32),      # packed logits
            jax.ShapeDtypeStruct((n_tiles, 1, _LANES), jnp.float32),  # loss partials
        ),
        grid=(n_tiles,),
        in_specs=[
            pl.BlockSpec((tbr, _LANES * D), lambda i: (i, 0)),       # x tile
            pl.BlockSpec((_LANES * D, _LANES), lambda i: (0, 0)),    # weights (resident)
            pl.BlockSpec(memory_space=pltpu.MemorySpace.SMEM),       # bias scalar
            pl.BlockSpec((tbr, _LANES), lambda i: (i, 0)),           # label tile
        ],
        out_specs=(
            pl.BlockSpec((tbr, _LANES), lambda i: (i, 0)),           # pred tile
            pl.BlockSpec((1, 1, _LANES), lambda i: (i, 0, 0)),       # loss partial
        ),
        compiler_params=pltpu.CompilerParams(
            dimension_semantics=("parallel",)),                      # no carried state
        cost_estimate=cost,
    )(xp, w_blk, b_s, yp)

    loss = jnp.sum(partials) / jnp.float32(B)
    pred = pred_packed.reshape(Bp, 1)[:B]
    return loss, pred


if __name__ == "__main__":
    key = jax.random.PRNGKey(0)
    D = 10

    k_w, k_b, k_data = jax.random.split(key, 3)
    bound = 1.0 / float(jnp.sqrt(jnp.float32(D)))
    # bf16-representable params/inputs so MXU pass-count choices cannot perturb
    # the kernel-vs-reference comparison.
    weight = jax.random.uniform(k_w, (1, D), jnp.float32, -bound, bound
                                ).astype(jnp.bfloat16).astype(jnp.float32)
    bias = jax.random.uniform(k_b, (1,), jnp.float32, -bound, bound
                              ).astype(jnp.bfloat16).astype(jnp.float32)

    cases = [
        # (batch, force_pallas, tile_rows)
        (8,    False, 128),   # small-batch fast path (pure XLA)
        (1024, True,  128),   # single-tile Pallas path
        (1000, True,  128),   # non-multiple-of-128 batch -> pad + in-kernel mask
        (2048, True,  8),     # multi-tile grid (2 parallel steps), tiny tiles
    ]

    for B, force, tr in cases:
        k_x, k_y, k_data = jax.random.split(k_data, 3)
        x = jax.random.uniform(k_x, (B, D), jnp.float32
                               ).astype(jnp.bfloat16).astype(jnp.float32)
        label = jax.random.bernoulli(k_y, 0.5, (B, 1)).astype(jnp.float32)

        loss, pred = test_module_forward(x, weight, bias, label,
                                         tile_rows=tr, force_pallas=force)
        jax.block_until_ready((loss, pred))

        loss_ref, pred_ref = _forward_jnp(x, weight, bias, label)
        assert pred.shape == (B, 1), f"pred shape mismatch B={B}"
        assert jnp.allclose(pred, pred_ref, atol=1e-4, rtol=1e-4), f"pred mismatch B={B}"
        assert jnp.allclose(loss, loss_ref, atol=1e-4, rtol=1e-4), f"loss mismatch B={B}"

    print("KERNEL_OK")
</pallas_src>

<mosaic_0001>
module attributes {stable_mosaic.version = 11 : i64} {
  func.func @_test_module_kernel(%arg0: i32, %arg1: memref<8x1280xf32, #tpu.memory_space<vmem>>, %arg2: memref<1280x128xf32, #tpu.memory_space<vmem>>, %arg3: memref<1xf32, #tpu.memory_space<smem>>, %arg4: memref<8x128xf32, #tpu.memory_space<vmem>>, %arg5: memref<8x128xf32, #tpu.memory_space<vmem>>, %arg6: memref<1x1x128xf32, #tpu.memory_space<vmem>>) attributes {dimension_semantics = [#tpu.dimension_semantics<parallel>], iteration_bounds = array<i64: 1>, scalar_prefetch = 0 : i64, scratch_operands = 0 : i64, tpu.core_type = #tpu.core_type<tc>, window_params = [{transform_indices = @transform_0, window_bounds = array<i64: 8, 1280>}, {pipeline_mode = #tpu.pipeline_mode<synchronous>, transform_indices = @transform_1, window_bounds = array<i64: 1280, 128>}, {transform_indices = @transform_2, window_bounds = array<i64: 1>}, {transform_indices = @transform_3, window_bounds = array<i64: 8, 128>}, {transform_indices = @transform_4, window_bounds = array<i64: 8, 128>}, {transform_indices = @transform_5, window_bounds = array<i64: 1, 1, 128>}]} {
    %c0 = arith.constant 0 : index
    %c0_0 = arith.constant 0 : index
    %0 = vector.load %arg1[%c0, %c0_0] : memref<8x1280xf32, #tpu.memory_space<vmem>>, vector<8x1280xf32>
    %c0_1 = arith.constant 0 : index
    %c0_2 = arith.constant 0 : index
    %1 = vector.load %arg2[%c0_1, %c0_2] : memref<1280x128xf32, #tpu.memory_space<vmem>>, vector<1280x128xf32>
    %cst = arith.constant dense<0.000000e+00> : vector<8x128xf32>
    %2 = tpu.matmul %0, %1, %cst {dimension_numbers = #tpu.dot_dimension_numbers<[1], [0], [0], [1], [0, 0, 1, 1], [], []>} : vector<8x1280xf32>, vector<1280x128xf32>, vector<8x128xf32> -> vector<8x128xf32>
    %c0_3 = arith.constant 0 : index
    %3 = memref.load %arg3[%c0_3] : memref<1xf32, #tpu.memory_space<smem>>
    %4 = vector.broadcast %3 : f32 to vector<8x128xf32>
    %5 = arith.addf %2, %4 : vector<8x128xf32>
    %c0_4 = arith.constant 0 : index
    %c0_5 = arith.constant 0 : index
    %6 = vector.load %arg5[%c0_4, %c0_5] : memref<8x128xf32, #tpu.memory_space<vmem>>, vector<8x128xf32>
    tpu.vector_store %arg5[%c0_4, %c0_5], %5 {strides = array<i32>} : memref<8x128xf32, #tpu.memory_space<vmem>>, vector<8x128xf32>,
    %c0_6 = arith.constant 0 : index
    %c0_7 = arith.constant 0 : index
    %7 = vector.load %arg4[%c0_6, %c0_7] : memref<8x128xf32, #tpu.memory_space<vmem>>, vector<8x128xf32>
    %cst_8 = arith.constant 0.000000e+00 : f32
    %8 = vector.broadcast %cst_8 : f32 to vector<8x128xf32>
    %9 = arith.maximumf %5, %8 : vector<8x128xf32>
    %10 = arith.mulf %5, %7 : vector<8x128xf32>
    %11 = arith.subf %9, %10 : vector<8x128xf32>
    %12 = math.absf %5 : vector<8x128xf32>
    %cst_9 = arith.constant 0.000000e+00 : f32
    %13 = vector.broadcast %cst_9 : f32 to vector<8x128xf32>
    %14 = arith.subf %13, %12 : vector<8x128xf32>
    %15 = math.exp %14 : vector<8x128xf32>
    %cst_10 = arith.constant 1.000000e+00 : f32
    %16 = vector.broadcast %cst_10 : f32 to vector<8x128xf32>
    %17 = arith.addf %16, %15 : vector<8x128xf32>
    %18 = math.log %17 : vector<8x128xf32>
    %19 = arith.addf %11, %18 : vector<8x128xf32>
    %20 = tpu.iota {dimensions = array<i32: 0>} : vector<8x128xi32>
    %21 = tpu.iota {dimensions = array<i32: 1>} : vector<8x128xi32>
    %c8_i32 = arith.constant 8 : i32
    %22 = arith.muli %arg0, %c8_i32 : i32
    %23 = vector.broadcast %22 : i32 to vector<8x128xi32>
    %24 = arith.addi %23, %20 : vector<8x128xi32>
    %c128_i32 = arith.constant 128 : i32
    %25 = vector.broadcast %c128_i32 : i32 to vector<8x128xi32>
    %26 = arith.muli %24, %25 : vector<8x128xi32>
    %27 = arith.addi %26, %21 : vector<8x128xi32>
    %c1024_i32 = arith.constant 1024 : i32
    %28 = vector.broadcast %c1024_i32 : i32 to vector<8x128xi32>
    %29 = arith.cmpi slt, %27, %28 : vector<8x128xi32>
    %cst_11 = arith.constant 0.000000e+00 : f32
    %30 = vector.broadcast %cst_11 : f32 to vector<8x128xf32>
    %31 = arith.select %29, %19, %30 : vector<8x128xi1>, vector<8x128xf32>
    %cst_12 = arith.constant dense<0.000000e+00> : vector<128xf32>
    %32 = vector.multi_reduction <add>, %31, %cst_12 [0] : vector<8x128xf32> to vector<128xf32>
    %33 = vector.shape_cast %32 : vector<128xf32> to vector<1x128xf32>
    %c0_13 = arith.constant 0 : index
    %c0_14 = arith.constant 0 : index
    %c0_15 = arith.constant 0 : index
    %34 = vector.load %arg6[%c0_13, %c0_14, %c0_15] : memref<1x1x128xf32, #tpu.memory_space<vmem>>, vector<1x1x128xf32>
    %35 = vector.shape_cast %34 : vector<1x1x128xf32> to vector<1x128xf32>
    %36 = vector.shape_cast %33 : vector<1x128xf32> to vector<1x1x128xf32>
    tpu.vector_store %arg6[%c0_13, %c0_14, %c0_15], %36 {strides = array<i32>} : memref<1x1x128xf32, #tpu.memory_space<vmem>>, vector<1x1x128xf32>,
    return
  }
  func.func @transform_0(%arg0: i32) -> (i32, i32) {
    %c0_i32 = arith.constant 0 : i32
    %c0_i32_0 = arith.constant 0 : i32
    return %arg0, %c0_i32 : i32, i32
  }
  func.func @transform_1(%arg0: i32) -> (i32, i32) {
    %c0_i32 = arith.constant 0 : i32
    %c0_i32_0 = arith.constant 0 : i32
    %c0_i32_1 = arith.constant 0 : i32
    return %c0_i32, %c0_i32_0 : i32, i32
  }
  func.func @transform_2(%arg0: i32) -> i32 {
    %c0_i32 = arith.constant 0 : i32
    %c0_i32_0 = arith.constant 0 : i32
    return %c0_i32 : i32
  }
  func.func @transform_3(%arg0: i32) -> (i32, i32) {
    %c0_i32 = arith.constant 0 : i32
    %c0_i32_0 = arith.constant 0 : i32
    return %arg0, %c0_i32 : i32, i32
  }
  func.func @transform_4(%arg0: i32) -> (i32, i32) {
    %c0_i32 = arith.constant 0 : i32
    %c0_i32_0 = arith.constant 0 : i32
    return %arg0, %c0_i32 : i32, i32
  }
  func.func @transform_5(%arg0: i32) -> (i32, i32, i32) {
    %c0_i32 = arith.constant 0 : i32
    %c0_i32_0 = arith.constant 0 : i32
    %c0_i32_1 = arith.constant 0 : i32
    return %arg0, %c0_i32, %c0_i32_0 : i32, i32, i32
  }
}

</mosaic_0001>

<llo_original>
// kernel: tpu_custom_call.1
$region0: #{tpu_custom_call.1}
  #allocation0 [shape = 'u32[]', space=smem, size = 0x4, offset = 0x4, fixed_abs, tag = 'smem constant byte address 0x4 - core index']
  #allocation1 [shape = 'u32[144,128]{1,0:T(1,128)}', space=vmem, size = 0x12000, scoped, tag = 'internal scratch']
  #allocation2 [shape = 'f32[1]{0:T(128)S(6)}', space=smem, size = 0x200, scoped, tag = 'scoped memory for tpu_custom_call.1']
  %s0 = inlined_call_operand.hbm [shape: f32[8,1280], index: 0, kind: input, shape index: {}]
  %s1 = inlined_call_operand.hbm [shape: f32[1280,128], index: 1, kind: input, shape index: {}]
  %s2 = inlined_call_operand.<no memory space> [shape: f32[1], index: 2, kind: input, shape index: {}]
  %s3 = inlined_call_operand.vmem [shape: f32[8,128], index: 3, kind: input, shape index: {}]
  %s4 = inlined_call_operand.hbm [shape: f32[8,128], index: 4, kind: output, shape index: {0}]
  %s5 = inlined_call_operand.hbm [shape: f32[1,1,128], index: 5, kind: output, shape index: {1}]
  %6 = xla_tuple %s4, %s5
  %s7 = sld [smem:[#allocation0]]
  $region42: #{tpu_custom_call.1} parent=0
    _
  %s9 = ssub.s32 1, %s7
  %s10 = scalar_select 0, %s9, %s7
  %11 = sst [smem:[#allocation2]] %s2
  $region1: #{tpu_custom_call.1} parent=0
    #allocation3 [shape = 'u8[40960]{0}', space=vmem, size = 0xa000, scoped, tag = 'input window, operand 0, single buffered']
    #allocation4 [shape = 's32[1]{0}', space=sflag, size = 0x4, scoped, tag = 'scoped memory for tpu_custom_call.1']
    #allocation5 [shape = 's32[1]{0}', space=sflag, size = 0x4, scoped, tag = 'scoped memory for tpu_custom_call.1']
    #allocation6 [shape = 'u8[655360]{0}', space=vmem, size = 0xa0000, scoped, tag = 'input window, operand 1, single buffered']
    #allocation7 [shape = 's32[1]{0}', space=sflag, size = 0x4, scoped, tag = 'scoped memory for tpu_custom_call.1']
    #allocation8 [shape = 'u8[4096]{0}', space=vmem, size = 0x1000, scoped, tag = 'output window, operand 0, single buffered']
    #allocation9 [shape = 'u8[512]{0}', space=vmem, size = 0x400, scoped, tag = 'output window, operand 1, single buffered']
    #allocation10 [shape = 's32[1]{0}', space=sflag, size = 0x4, scoped, tag = 'scoped memory for tpu_custom_call.1']
    %12 = vsyncpa [#allocation4], 0
    %13 = vsyncpa [#allocation7], 0
    %14 = vsyncpa [#allocation5], 0
    %15 = vsyncpa [#allocation10], 0
    // Predicated region
    $region2: #{tpu_custom_call.1} parent=1 // pred_check
      _
    $region3: #{tpu_custom_call.1} parent=1 // pred_check_branch
      %17 = sbr.rel (0) target = $region5
    $region4: #{tpu_custom_call.1} parent=1 // pred_region
      %s19 = ssub.s32 1280, 1280
      %20 = vsyncadd [#allocation4], %s19
      %s22 = sshll.u32 [#allocation3], 4
      %s23 = int_to_ptr.vmem [resolvable:$true] %s22
      %25 = dma.hbm_to_vmem [thread:$0]  %s0, 1280, %s23, [#allocation4]
    $region5: #{tpu_custom_call.1} parent=1 // pred_fallthru
      _
    // Predicated region
    $region6: #{tpu_custom_call.1} parent=1 // pred_check
      _
    $region7: #{tpu_custom_call.1} parent=1 // pred_check_branch
      %27 = sbr.rel (0) target = $region9
    $region8: #{tpu_custom_call.1} parent=1 // pred_region
      %s29 = ssub.s32 20480, 20480
      %30 = vsyncadd [#allocation7], %s29
      %s31 = sshll.u32 [#allocation6], 4
      %s32 = int_to_ptr.vmem [resolvable:$true] %s31
      %37 = dma.hbm_to_vmem [thread:$0]  %s1, 20480, %s32, [#allocation7], 128, 128, 8
    $region9: #{tpu_custom_call.1} parent=1 // pred_fallthru
      _
    // Predicated region
    $region10: #{tpu_custom_call.1} parent=1 // pred_check
      _
    $region11: #{tpu_custom_call.1} parent=1 // pred_check_branch
      %39 = sbr.rel (0) target = $region13
    $region12: #{tpu_custom_call.1} parent=1 // pred_region
      _
    $region13: #{tpu_custom_call.1} parent=1 // pred_fallthru
      _
    // Predicated region
    $region14: #{tpu_custom_call.1} parent=1 // pred_check
      _
    $region15: #{tpu_custom_call.1} parent=1 // pred_check_branch
      %41 = sbr.rel (0) target = $region17
    $region16: #{tpu_custom_call.1} parent=1 // pred_region
      _
    $region17: #{tpu_custom_call.1} parent=1 // pred_fallthru
      _
    // Predicated region
    $region18: #{tpu_custom_call.1} parent=1 // pred_check
      _
    $region19: #{tpu_custom_call.1} parent=1 // pred_check_branch
      %43 = sbr.rel (0) target = $region21
    $region20: #{tpu_custom_call.1} parent=1 // pred_region
      %44 = dma.done [#allocation4], 1280
    $region21: #{tpu_custom_call.1} parent=1 // pred_fallthru
      _
    // Predicated region
    $region22: #{tpu_custom_call.1} parent=1 // pred_check
      _
    $region23: #{tpu_custom_call.1} parent=1 // pred_check_branch
      %46 = sbr.rel (0) target = $region25
    $region24: #{tpu_custom_call.1} parent=1 // pred_region
      %47 = dma.done [#allocation7], 20480
    $region25: #{tpu_custom_call.1} parent=1 // pred_fallthru
      _
    %v48 = vld [vmem:[#allocation3] sm:$0xff]
    %v49 = vld [vmem:[#allocation3 + $0x8] sm:$0xff]
    %v50 = vld [vmem:[#allocation3 + $0x10] sm:$0xff]
    %v51 = vld [vmem:[#allocation3 + $0x18] sm:$0xff]
    %v52 = vld [vmem:[#allocation3 + $0x20] sm:$0xff]
    %v53 = vld [vmem:[#allocation3 + $0x28] sm:$0xff]
    %v54 = vld [vmem:[#allocation3 + $0x30] sm:$0xff]
    %v55 = vld [vmem:[#allocation3 + $0x38] sm:$0xff]
    %v56 = vld [vmem:[#allocation3 + $0x40] sm:$0xff]
    %v57 = vld [vmem:[#allocation3 + $0x48] sm:$0xff]
    %v58 = vld [vmem:[#allocation6] sm:$0xff]
    %v59 = vld [vmem:[#allocation6 + $0x8] sm:$0xff]
    %v60 = vld [vmem:[#allocation6 + $0x10] sm:$0xff]
    %v61 = vld [vmem:[#allocation6 + $0x18] sm:$0xff]
    %v62 = vld [vmem:[#allocation6 + $0x20] sm:$0xff]
    %v63 = vld [vmem:[#allocation6 + $0x28] sm:$0xff]
    %v64 = vld [vmem:[#allocation6 + $0x30] sm:$0xff]
    %v65 = vld [vmem:[#allocation6 + $0x38] sm:$0xff]
    %v66 = vld [vmem:[#allocation6 + $0x40] sm:$0xff]
    %v67 = vld [vmem:[#allocation6 + $0x48] sm:$0xff]
    %v68 = vld [vmem:[#allocation6 + $0x50] sm:$0xff]
    %v69 = vld [vmem:[#allocation6 + $0x58] sm:$0xff]
    %v70 = vld [vmem:[#allocation6 + $0x60] sm:$0xff]
    %v71 = vld [vmem:[#allocation6 + $0x68] sm:$0xff]
    %v72 = vld [vmem:[#allocation6 + $0x70] sm:$0xff]
    %v73 = vld [vmem:[#allocation6 + $0x78] sm:$0xff]
    %v74 = vld [vmem:[#allocation6 + $0x80] sm:$0xff]
    %v75 = vld [vmem:[#allocation6 + $0x88] sm:$0xff]
    %v76 = vld [vmem:[#allocation6 + $0x90] sm:$0xff]
    %v77 = vld [vmem:[#allocation6 + $0x98] sm:$0xff]
    %v78 = vld [vmem:[#allocation6 + $0xa0] sm:$0xff]
    %v79 = vld [vmem:[#allocation6 + $0xa8] sm:$0xff]
    %v80 = vld [vmem:[#allocation6 + $0xb0] sm:$0xff]
    %v81 = vld [vmem:[#allocation6 + $0xb8] sm:$0xff]
    %v82 = vld [vmem:[#allocation6 + $0xc0] sm:$0xff]
    %v83 = vld [vmem:[#allocation6 + $0xc8] sm:$0xff]
    %v84 = vld [vmem:[#allocation6 + $0xd0] sm:$0xff]
    %v85 = vld [vmem:[#allocation6 + $0xd8] sm:$0xff]
    %v86 = vld [vmem:[#allocation6 + $0xe0] sm:$0xff]
    %v87 = vld [vmem:[#allocation6 + $0xe8] sm:$0xff]
    %v88 = vld [vmem:[#allocation6 + $0xf0] sm:$0xff]
    %v89 = vld [vmem:[#allocation6 + $0xf8] sm:$0xff]
    %v90 = vld [vmem:[#allocation6 + $0x100] sm:$0xff]
    %v91 = vld [vmem:[#allocation6 + $0x108] sm:$0xff]
    %v92 = vld [vmem:[#allocation6 + $0x110] sm:$0xff]
    %v93 = vld [vmem:[#allocation6 + $0x118] sm:$0xff]
    %v94 = vld [vmem:[#allocation6 + $0x120] sm:$0xff]
    %v95 = vld [vmem:[#allocation6 + $0x128] sm:$0xff]
    %v96 = vld [vmem:[#allocation6 + $0x130] sm:$0xff]
    %v97 = vld [vmem:[#allocation6 + $0x138] sm:$0xff]
    %v98 = vld [vmem:[#allocation6 + $0x140] sm:$0xff]
    %v99 = vld [vmem:[#allocation6 + $0x148] sm:$0xff]
    %v100 = vld [vmem:[#allocation6 + $0x150] sm:$0xff]
    %v101 = vld [vmem:[#allocation6 + $0x158] sm:$0xff]
    %v102 = vld [vmem:[#allocation6 + $0x160] sm:$0xff]
    %v103 = vld [vmem:[#allocation6 + $0x168] sm:$0xff]
    %v104 = vld [vmem:[#allocation6 + $0x170] sm:$0xff]
    %v105 = vld [vmem:[#allocation6 + $0x178] sm:$0xff]
    %v106 = vld [vmem:[#allocation6 + $0x180] sm:$0xff]
    %v107 = vld [vmem:[#allocation6 + $0x188] sm:$0xff]
    %v108 = vld [vmem:[#allocation6 + $0x190] sm:$0xff]
    %v109 = vld [vmem:[#allocation6 + $0x198] sm:$0xff]
    %v110 = vld [vmem:[#allocation6 + $0x1a0] sm:$0xff]
    %v111 = vld [vmem:[#allocation6 + $0x1a8] sm:$0xff]
    %v112 = vld [vmem:[#allocation6 + $0x1b0] sm:$0xff]
    %v113 = vld [vmem:[#allocation6 + $0x1b8] sm:$0xff]
    %v114 = vld [vmem:[#allocation6 + $0x1c0] sm:$0xff]
    %v115 = vld [vmem:[#allocation6 + $0x1c8] sm:$0xff]
    %v116 = vld [vmem:[#allocation6 + $0x1d0] sm:$0xff]
    %v117 = vld [vmem:[#allocation6 + $0x1d8] sm:$0xff]
    %v118 = vld [vmem:[#allocation6 + $0x1e0] sm:$0xff]
    %v119 = vld [vmem:[#allocation6 + $0x1e8] sm:$0xff]
    %v120 = vld [vmem:[#allocation6 + $0x1f0] sm:$0xff]
    %v121 = vld [vmem:[#allocation6 + $0x1f8] sm:$0xff]
    %v122 = vld [vmem:[#allocation6 + $0x200] sm:$0xff]
    %v123 = vld [vmem:[#allocation6 + $0x208] sm:$0xff]
    %v124 = vld [vmem:[#allocation6 + $0x210] sm:$0xff]
    %v125 = vld [vmem:[#allocation6 + $0x218] sm:$0xff]
    %v126 = vld [vmem:[#allocation6 + $0x220] sm:$0xff]
    %v127 = vld [vmem:[#allocation6 + $0x228] sm:$0xff]
    %v128 = vld [vmem:[#allocation6 + $0x230] sm:$0xff]
    %v129 = vld [vmem:[#allocation6 + $0x238] sm:$0xff]
    %v130 = vld [vmem:[#allocation6 + $0x240] sm:$0xff]
    %v131 = vld [vmem:[#allocation6 + $0x248] sm:$0xff]
    %v132 = vld [vmem:[#allocation6 + $0x250] sm:$0xff]
    %v133 = vld [vmem:[#allocation6 + $0x258] sm:$0xff]
    %v134 = vld [vmem:[#allocation6 + $0x260] sm:$0xff]
    %v135 = vld [vmem:[#allocation6 + $0x268] sm:$0xff]
    %v136 = vld [vmem:[#allocation6 + $0x270] sm:$0xff]
    %v137 = vld [vmem:[#allocation6 + $0x278] sm:$0xff]
    %v138 = vld [vmem:[#allocation6 + $0x280] sm:$0xff]
    %v139 = vld [vmem:[#allocation6 + $0x288] sm:$0xff]
    %v140 = vld [vmem:[#allocation6 + $0x290] sm:$0xff]
    %v141 = vld [vmem:[#allocation6 + $0x298] sm:$0xff]
    %v142 = vld [vmem:[#allocation6 + $0x2a0] sm:$0xff]
    %v143 = vld [vmem:[#allocation6 + $0x2a8] sm:$0xff]
    %v144 = vld [vmem:[#allocation6 + $0x2b0] sm:$0xff]
    %v145 = vld [vmem:[#allocation6 + $0x2b8] sm:$0xff]
    %v146 = vld [vmem:[#allocation6 + $0x2c0] sm:$0xff]
    %v147 = vld [vmem:[#allocation6 + $0x2c8] sm:$0xff]
    %v148 = vld [vmem:[#allocation6 + $0x2d0] sm:$0xff]
    %v149 = vld [vmem:[#allocation6 + $0x2d8] sm:$0xff]
    %v150 = vld [vmem:[#allocation6 + $0x2e0] sm:$0xff]
    %v151 = vld [vmem:[#allocation6 + $0x2e8] sm:$0xff]
    %v152 = vld [vmem:[#allocation6 + $0x2f0] sm:$0xff]
    %v153 = vld [vmem:[#allocation6 + $0x2f8] sm:$0xff]
    %v154 = vld [vmem:[#allocation6 + $0x300] sm:$0xff]
    %v155 = vld [vmem:[#allocation6 + $0x308] sm:$0xff]
    %v156 = vld [vmem:[#allocation6 + $0x310] sm:$0xff]
    %v157 = vld [vmem:[#allocation6 + $0x318] sm:$0xff]
    %v158 = vld [vmem:[#allocation6 + $0x320] sm:$0xff]
    %v159 = vld [vmem:[#allocation6 + $0x328] sm:$0xff]
    %v160 = vld [vmem:[#allocation6 + $0x330] sm:$0xff]
    %v161 = vld [vmem:[#allocation6 + $0x338] sm:$0xff]
    %v162 = vld [vmem:[#allocation6 + $0x340] sm:$0xff]
    %v163 = vld [vmem:[#allocation6 + $0x348] sm:$0xff]
    %v164 = vld [vmem:[#allocation6 + $0x350] sm:$0xff]
    %v165 = vld [vmem:[#allocation6 + $0x358] sm:$0xff]
    %v166 = vld [vmem:[#allocation6 + $0x360] sm:$0xff]
    %v167 = vld [vmem:[#allocation6 + $0x368] sm:$0xff]
    %v168 = vld [vmem:[#allocation6 + $0x370] sm:$0xff]
    %v169 = vld [vmem:[#allocation6 + $0x378] sm:$0xff]
    %v170 = vld [vmem:[#allocation6 + $0x380] sm:$0xff]
    %v171 = vld [vmem:[#allocation6 + $0x388] sm:$0xff]
    %v172 = vld [vmem:[#allocation6 + $0x390] sm:$0xff]
    %v173 = vld [vmem:[#allocation6 + $0x398] sm:$0xff]
    %v174 = vld [vmem:[#allocation6 + $0x3a0] sm:$0xff]
    %v175 = vld [vmem:[#allocation6 + $0x3a8] sm:$0xff]
    %v176 = vld [vmem:[#allocation6 + $0x3b0] sm:$0xff]
    %v177 = vld [vmem:[#allocation6 + $0x3b8] sm:$0xff]
    %v178 = vld [vmem:[#allocation6 + $0x3c0] sm:$0xff]
    %v179 = vld [vmem:[#allocation6 + $0x3c8] sm:$0xff]
    %v180 = vld [vmem:[#allocation6 + $0x3d0] sm:$0xff]
    %v181 = vld [vmem:[#allocation6 + $0x3d8] sm:$0xff]
    %v182 = vld [vmem:[#allocation6 + $0x3e0] sm:$0xff]
    %v183 = vld [vmem:[#allocation6 + $0x3e8] sm:$0xff]
    %v184 = vld [vmem:[#allocation6 + $0x3f0] sm:$0xff]
    %v185 = vld [vmem:[#allocation6 + $0x3f8] sm:$0xff]
    %v186 = vld [vmem:[#allocation6 + $0x400] sm:$0xff]
    %v187 = vld [vmem:[#allocation6 + $0x408] sm:$0xff]
    %v188 = vld [vmem:[#allocation6 + $0x410] sm:$0xff]
    %v189 = vld [vmem:[#allocation6 + $0x418] sm:$0xff]
    %v190 = vld [vmem:[#allocation6 + $0x420] sm:$0xff]
    %v191 = vld [vmem:[#allocation6 + $0x428] sm:$0xff]
    %v192 = vld [vmem:[#allocation6 + $0x430] sm:$0xff]
    %v193 = vld [vmem:[#allocation6 + $0x438] sm:$0xff]
    %v194 = vld [vmem:[#allocation6 + $0x440] sm:$0xff]
    %v195 = vld [vmem:[#allocation6 + $0x448] sm:$0xff]
    %v196 = vld [vmem:[#allocation6 + $0x450] sm:$0xff]
    %v197 = vld [vmem:[#allocation6 + $0x458] sm:$0xff]
    %v198 = vld [vmem:[#allocation6 + $0x460] sm:$0xff]
    %v199 = vld [vmem:[#allocation6 + $0x468] sm:$0xff]
    %v200 = vld [vmem:[#allocation6 + $0x470] sm:$0xff]
    %v201 = vld [vmem:[#allocation6 + $0x478] sm:$0xff]
    %v202 = vld [vmem:[#allocation6 + $0x480] sm:$0xff]
    %v203 = vld [vmem:[#allocation6 + $0x488] sm:$0xff]
    %v204 = vld [vmem:[#allocation6 + $0x490] sm:$0xff]
    %v205 = vld [vmem:[#allocation6 + $0x498] sm:$0xff]
    %v206 = vld [vmem:[#allocation6 + $0x4a0] sm:$0xff]
    %v207 = vld [vmem:[#allocation6 + $0x4a8] sm:$0xff]
    %v208 = vld [vmem:[#allocation6 + $0x4b0] sm:$0xff]
    %v209 = vld [vmem:[#allocation6 + $0x4b8] sm:$0xff]
    %v210 = vld [vmem:[#allocation6 + $0x4c0] sm:$0xff]
    %v211 = vld [vmem:[#allocation6 + $0x4c8] sm:$0xff]
    %v212 = vld [vmem:[#allocation6 + $0x4d0] sm:$0xff]
    %v213 = vld [vmem:[#allocation6 + $0x4d8] sm:$0xff]
    %v214 = vld [vmem:[#allocation6 + $0x4e0] sm:$0xff]
    %v215 = vld [vmem:[#allocation6 + $0x4e8] sm:$0xff]
    %v216 = vld [vmem:[#allocation6 + $0x4f0] sm:$0xff]
    %v217 = vld [vmem:[#allocation6 + $0x4f8] sm:$0xff]
    %s218 = sld [smem:[#allocation2]]
    %v219 = vstv %s218
    %220 = vmatprep.subr.mxu0 0.0
    %221 = vmatpush1.msra.mxu0 %v58
    %222 = vmatprep.subr.mxu0 0.0
    %223 = vmatpush1.msra.mxu0 %v59
    %224 = vmatprep.subr.mxu0 0.0
    %225 = vmatpush1.msra.mxu0 %v60
    %226 = vmatprep.subr.mxu0 0.0
    %227 = vmatpush1.msra.mxu0 %v61
    %228 = vmatprep.subr.mxu0 0.0
    %229 = vmatpush1.msra.mxu0 %v62
    %230 = vmatprep.subr.mxu0 0.0
    %231 = vmatpush1.msra.mxu0 %v63
    %232 = vmatprep.subr.mxu0 0.0
    %233 = vmatpush1.msra.mxu0 %v64
    %234 = vmatprep.subr.mxu0 0.0
    %235 = vmatpush1.msra.mxu0 %v65
    %236 = vmatprep.subr.mxu0 0.0
    %237 = vmatpush1.msra.mxu0 %v66
    %238 = vmatprep.subr.mxu0 0.0
    %239 = vmatpush1.msra.mxu0 %v67
    %240 = vmatprep.subr.mxu0 0.0
    %241 = vmatpush1.msra.mxu0 %v68
    %242 = vmatprep.subr.mxu0 0.0
    %243 = vmatpush1.msra.mxu0 %v69
    %244 = vmatprep.subr.mxu0 0.0
    %245 = vmatpush1.msra.mxu0 %v70
    %246 = vmatprep.subr.mxu0 0.0
    %247 = vmatpush1.msra.mxu0 %v71
    %248 = vmatprep.subr.mxu0 0.0
    %249 = vmatpush1.msra.mxu0 %v72
    %250 = vmatprep.subr.mxu0 0.0
    %251 = vmatpush1.msra.mxu0 %v73
    %252 = vmatprep.subr.mxu0 0.0
    %253 = vmatpush1.msra.mxu0 %v74
    %254 = vmatprep.subr.mxu0 0.0
    %255 = vmatpush1.msra.mxu0 %v75
    %256 = vmatprep.subr.mxu0 0.0
    %257 = vmatpush1.msra.mxu0 %v76
    %258 = vmatprep.subr.mxu0 0.0
    %259 = vmatpush1.msra.mxu0 %v77
    %260 = vmatprep.subr.mxu0 0.0
    %261 = vmatpush1.msra.mxu0 %v78
    %262 = vmatprep.subr.mxu0 0.0
    %263 = vmatpush1.msra.mxu0 %v79
    %264 = vmatprep.subr.mxu0 0.0
    %265 = vmatpush1.msra.mxu0 %v80
    %266 = vmatprep.subr.mxu0 0.0
    %267 = vmatpush1.msra.mxu0 %v81
    %268 = vmatprep.subr.mxu0 0.0
    %269 = vmatpush1.msra.mxu0 %v82
    %270 = vmatprep.subr.mxu0 0.0
    %271 = vmatpush1.msra.mxu0 %v83
    %272 = vmatprep.subr.mxu0 0.0
    %273 = vmatpush1.msra.mxu0 %v84
    %274 = vmatprep.subr.mxu0 0.0
    %275 = vmatpush1.msra.mxu0 %v85
    %276 = vmatprep.subr.mxu0 0.0
    %277 = vmatpush1.msra.mxu0 %v86
    %278 = vmatprep.subr.mxu0 0.0
    %279 = vmatpush1.msra.mxu0 %v87
    %280 = vmatprep.subr.mxu0 0.0
    %281 = vmatpush1.msra.mxu0 %v88
    %282 = vmatprep.subr.mxu0 0.0
    %283 = vmatpush1.msra.mxu0 %v89
    %284 = vmatprep.mubr.f32.mxu0 %v49
    %285 = vmatmul.mubr.f32.gmra.mrb[0].mxu0 %v48
    %v286 = vpop.f32.mrb[0].mxu0
    %v287 = vadd.f32 %v219, %v286
    %v288 = vpop.f32.mrb[0].mxu0
    %289 = vdwg.mxu0
    %290 = vmatprep.subr.mxu0 0.0
    %291 = vmatpush1.msra.mxu0 %v90
    %292 = vmatprep.subr.mxu0 0.0
    %293 = vmatpush1.msra.mxu0 %v91
    %294 = vmatprep.subr.mxu0 0.0
    %295 = vmatpush1.msra.mxu0 %v92
    %296 = vmatprep.subr.mxu0 0.0
    %297 = vmatpush1.msra.mxu0 %v93
    %298 = vmatprep.subr.mxu0 0.0
    %299 = vmatpush1.msra.mxu0 %v94
    %300 = vmatprep.subr.mxu0 0.0
    %301 = vmatpush1.msra.mxu0 %v95
    %302 = vmatprep.subr.mxu0 0.0
    %303 = vmatpush1.msra.mxu0 %v96
    %304 = vmatprep.subr.mxu0 0.0
    %305 = vmatpush1.msra.mxu0 %v97
    %306 = vmatprep.subr.mxu0 0.0
    %307 = vmatpush1.msra.mxu0 %v98
    %308 = vmatprep.subr.mxu0 0.0
    %309 = vmatpush1.msra.mxu0 %v99
    %310 = vmatprep.subr.mxu0 0.0
    %311 = vmatpush1.msra.mxu0 %v100
    %312 = vmatprep.subr.mxu0 0.0
    %313 = vmatpush1.msra.mxu0 %v101
    %314 = vmatprep.subr.mxu0 0.0
    %315 = vmatpush1.msra.mxu0 %v102
    %316 = vmatprep.subr.mxu0 0.0
    %317 = vmatpush1.msra.mxu0 %v103
    %318 = vmatprep.subr.mxu0 0.0
    %319 = vmatpush1.msra.mxu0 %v104
    %320 = vmatprep.subr.mxu0 0.0
    %321 = vmatpush1.msra.mxu0 %v105
    %322 = vmatprep.subr.mxu0 0.0
    %323 = vmatpush1.msra.mxu0 %v106
    %324 = vmatprep.subr.mxu0 0.0
    %325 = vmatpush1.msra.mxu0 %v107
    %326 = vmatprep.subr.mxu0 0.0
    %327 = vmatpush1.msra.mxu0 %v108
    %328 = vmatprep.subr.mxu0 0.0
    %329 = vmatpush1.msra.mxu0 %v109
    %330 = vmatprep.subr.mxu0 0.0
    %331 = vmatpush1.msra.mxu0 %v110
    %332 = vmatprep.subr.mxu0 0.0
    %333 = vmatpush1.msra.mxu0 %v111
    %334 = vmatprep.subr.mxu0 0.0
    %335 = vmatpush1.msra.mxu0 %v112
    %336 = vmatprep.subr.mxu0 0.0
    %337 = vmatpush1.msra.mxu0 %v113
    %338 = vmatprep.subr.mxu0 0.0
    %339 = vmatpush1.msra.mxu0 %v114
    %340 = vmatprep.subr.mxu0 0.0
    %341 = vmatpush1.msra.mxu0 %v115
    %342 = vmatprep.subr.mxu0 0.0
    %343 = vmatpush1.msra.mxu0 %v116
    %344 = vmatprep.subr.mxu0 0.0
    %345 = vmatpush1.msra.mxu0 %v117
    %346 = vmatprep.subr.mxu0 0.0
    %347 = vmatpush1.msra.mxu0 %v118
    %348 = vmatprep.subr.mxu0 0.0
    %349 = vmatpush1.msra.mxu0 %v119
    %350 = vmatprep.subr.mxu0 0.0
    %351 = vmatpush1.msra.mxu0 %v120
    %352 = vmatprep.subr.mxu0 0.0
    %353 = vmatpush1.msra.mxu0 %v121
    %354 = vmatprep.mubr.f32.mxu0 %v51
    %355 = vmatmul.mubr.f32.gmra.mrb[0].mxu0 %v50
    %v356 = vpop.f32.mrb[0].mxu0
    %v357 = vadd.f32 %v287, %v356
    %v358 = vpop.f32.mrb[0].mxu0
    %359 = vdwg.mxu0
    %360 = vmatprep.subr.mxu0 0.0
    %361 = vmatpush1.msra.mxu0 %v122
    %362 = vmatprep.subr.mxu0 0.0
    %363 = vmatpush1.msra.mxu0 %v123
    %364 = vmatprep.subr.mxu0 0.0
    %365 = vmatpush1.msra.mxu0 %v124
    %366 = vmatprep.subr.mxu0 0.0
    %367 = vmatpush1.msra.mxu0 %v125
    %368 = vmatprep.subr.mxu0 0.0
    %369 = vmatpush1.msra.mxu0 %v126
    %370 = vmatprep.subr.mxu0 0.0
    %371 = vmatpush1.msra.mxu0 %v127
    %372 = vmatprep.subr.mxu0 0.0
    %373 = vmatpush1.msra.mxu0 %v128
    %374 = vmatprep.subr.mxu0 0.0
    %375 = vmatpush1.msra.mxu0 %v129
    %376 = vmatprep.subr.mxu0 0.0
    %377 = vmatpush1.msra.mxu0 %v130
    %378 = vmatprep.subr.mxu0 0.0
    %379 = vmatpush1.msra.mxu0 %v131
    %380 = vmatprep.subr.mxu0 0.0
    %381 = vmatpush1.msra.mxu0 %v132
    %382 = vmatprep.subr.mxu0 0.0
    %383 = vmatpush1.msra.mxu0 %v133
    %384 = vmatprep.subr.mxu0 0.0
    %385 = vmatpush1.msra.mxu0 %v134
    %386 = vmatprep.subr.mxu0 0.0
    %387 = vmatpush1.msra.mxu0 %v135
    %388 = vmatprep.subr.mxu0 0.0
    %389 = vmatpush1.msra.mxu0 %v136
    %390 = vmatprep.subr.mxu0 0.0
    %391 = vmatpush1.msra.mxu0 %v137
    %392 = vmatprep.subr.mxu0 0.0
    %393 = vmatpush1.msra.mxu0 %v138
    %394 = vmatprep.subr.mxu0 0.0
    %395 = vmatpush1.msra.mxu0 %v139
    %396 = vmatprep.subr.mxu0 0.0
    %397 = vmatpush1.msra.mxu0 %v140
    %398 = vmatprep.subr.mxu0 0.0
    %399 = vmatpush1.msra.mxu0 %v141
    %400 = vmatprep.subr.mxu0 0.0
    %401 = vmatpush1.msra.mxu0 %v142
    %402 = vmatprep.subr.mxu0 0.0
    %403 = vmatpush1.msra.mxu0 %v143
    %404 = vmatprep.subr.mxu0 0.0
    %405 = vmatpush1.msra.mxu0 %v144
    %406 = vmatprep.subr.mxu0 0.0
    %407 = vmatpush1.msra.mxu0 %v145
    %408 = vmatprep.subr.mxu0 0.0
    %409 = vmatpush1.msra.mxu0 %v146
    %410 = vmatprep.subr.mxu0 0.0
    %411 = vmatpush1.msra.mxu0 %v147
    %412 = vmatprep.subr.mxu0 0.0
    %413 = vmatpush1.msra.mxu0 %v148
    %414 = vmatprep.subr.mxu0 0.0
    %415 = vmatpush1.msra.mxu0 %v149
    %416 = vmatprep.subr.mxu0 0.0
    %417 = vmatpush1.msra.mxu0 %v150
    %418 = vmatprep.subr.mxu0 0.0
    %419 = vmatpush1.msra.mxu0 %v151
    %420 = vmatprep.subr.mxu0 0.0
    %421 = vmatpush1.msra.mxu0 %v152
    %422 = vmatprep.subr.mxu0 0.0
    %423 = vmatpush1.msra.mxu0 %v153
    %424 = vmatprep.mubr.f32.mxu0 %v53
    %425 = vmatmul.mubr.f32.gmra.mrb[0].mxu0 %v52
    %v426 = vpop.f32.mrb[0].mxu0
    %v427 = vadd.f32 %v357, %v426
    %v428 = vpop.f32.mrb[0].mxu0
    %429 = vdwg.mxu0
    %430 = vmatprep.subr.mxu0 0.0
    %431 = vmatpush1.msra.mxu0 %v154
    %432 = vmatprep.subr.mxu0 0.0
    %433 = vmatpush1.msra.mxu0 %v155
    %434 = vmatprep.subr.mxu0 0.0
    %435 = vmatpush1.msra.mxu0 %v156
    %436 = vmatprep.subr.mxu0 0.0
    %437 = vmatpush1.msra.mxu0 %v157
    %438 = vmatprep.subr.mxu0 0.0
    %439 = vmatpush1.msra.mxu0 %v158
    %440 = vmatprep.subr.mxu0 0.0
    %441 = vmatpush1.msra.mxu0 %v159
    %442 = vmatprep.subr.mxu0 0.0
    %443 = vmatpush1.msra.mxu0 %v160
    %444 = vmatprep.subr.mxu0 0.0
    %445 = vmatpush1.msra.mxu0 %v161
    %446 = vmatprep.subr.mxu0 0.0
    %447 = vmatpush1.msra.mxu0 %v162
    %448 = vmatprep.subr.mxu0 0.0
    %449 = vmatpush1.msra.mxu0 %v163
    %450 = vmatprep.subr.mxu0 0.0
    %451 = vmatpush1.msra.mxu0 %v164
    %452 = vmatprep.subr.mxu0 0.0
    %453 = vmatpush1.msra.mxu0 %v165
    %454 = vmatprep.subr.mxu0 0.0
    %455 = vmatpush1.msra.mxu0 %v166
    %456 = vmatprep.subr.mxu0 0.0
    %457 = vmatpush1.msra.mxu0 %v167
    %458 = vmatprep.subr.mxu0 0.0
    %459 = vmatpush1.msra.mxu0 %v168
    %460 = vmatprep.subr.mxu0 0.0
    %461 = vmatpush1.msra.mxu0 %v169
    %462 = vmatprep.subr.mxu0 0.0
    %463 = vmatpush1.msra.mxu0 %v170
    %464 = vmatprep.subr.mxu0 0.0
    %465 = vmatpush1.msra.mxu0 %v171
    %466 = vmatprep.subr.mxu0 0.0
    %467 = vmatpush1.msra.mxu0 %v172
    %468 = vmatprep.subr.mxu0 0.0
    %469 = vmatpush1.msra.mxu0 %v173
    %470 = vmatprep.subr.mxu0 0.0
    %471 = vmatpush1.msra.mxu0 %v174
    %472 = vmatprep.subr.mxu0 0.0
    %473 = vmatpush1.msra.mxu0 %v175
    %474 = vmatprep.subr.mxu0 0.0
    %475 = vmatpush1.msra.mxu0 %v176
    %476 = vmatprep.subr.mxu0 0.0
    %477 = vmatpush1.msra.mxu0 %v177
    %478 = vmatprep.subr.mxu0 0.0
    %479 = vmatpush1.msra.mxu0 %v178
    %480 = vmatprep.subr.mxu0 0.0
    %481 = vmatpush1.msra.mxu0 %v179
    %482 = vmatprep.subr.mxu0 0.0
    %483 = vmatpush1.msra.mxu0 %v180
    %484 = vmatprep.subr.mxu0 0.0
    %485 = vmatpush1.msra.mxu0 %v181
    %486 = vmatprep.subr.mxu0 0.0
    %487 = vmatpush1.msra.mxu0 %v182
    %488 = vmatprep.subr.mxu0 0.0
    %489 = vmatpush1.msra.mxu0 %v183
    %490 = vmatprep.subr.mxu0 0.0
    %491 = vmatpush1.msra.mxu0 %v184
    %492 = vmatprep.subr.mxu0 0.0
    %493 = vmatpush1.msra.mxu0 %v185
    %494 = vmatprep.mubr.f32.mxu0 %v55
    %495 = vmatmul.mubr.f32.gmra.mrb[0].mxu0 %v54
    %v496 = vpop.f32.mrb[0].mxu0
    %v497 = vadd.f32 %v427, %v496
    %v498 = vpop.f32.mrb[0].mxu0
    %499 = vdwg.mxu0
    %500 = vmatprep.subr.mxu0 0.0
    %501 = vmatpush1.msra.mxu0 %v186
    %502 = vmatprep.subr.mxu0 0.0
    %503 = vmatpush1.msra.mxu0 %v187
    %504 = vmatprep.subr.mxu0 0.0
    %505 = vmatpush1.msra.mxu0 %v188
    %506 = vmatprep.subr.mxu0 0.0
    %507 = vmatpush1.msra.mxu0 %v189
    %508 = vmatprep.subr.mxu0 0.0
    %509 = vmatpush1.msra.mxu0 %v190
    %510 = vmatprep.subr.mxu0 0.0
    %511 = vmatpush1.msra.mxu0 %v191
    %512 = vmatprep.subr.mxu0 0.0
    %513 = vmatpush1.msra.mxu0 %v192
    %514 = vmatprep.subr.mxu0 0.0
    %515 = vmatpush1.msra.mxu0 %v193
    %516 = vmatprep.subr.mxu0 0.0
    %517 = vmatpush1.msra.mxu0 %v194
    %518 = vmatprep.subr.mxu0 0.0
    %519 = vmatpush1.msra.mxu0 %v195
    %520 = vmatprep.subr.mxu0 0.0
    %521 = vmatpush1.msra.mxu0 %v196
    %522 = vmatprep.subr.mxu0 0.0
    %523 = vmatpush1.msra.mxu0 %v197
    %524 = vmatprep.subr.mxu0 0.0
    %525 = vmatpush1.msra.mxu0 %v198
    %526 = vmatprep.subr.mxu0 0.0
    %527 = vmatpush1.msra.mxu0 %v199
    %528 = vmatprep.subr.mxu0 0.0
    %529 = vmatpush1.msra.mxu0 %v200
    %530 = vmatprep.subr.mxu0 0.0
    %531 = vmatpush1.msra.mxu0 %v201
    %532 = vmatprep.subr.mxu0 0.0
    %533 = vmatpush1.msra.mxu0 %v202
    %534 = vmatprep.subr.mxu0 0.0
    %535 = vmatpush1.msra.mxu0 %v203
    %536 = vmatprep.subr.mxu0 0.0
    %537 = vmatpush1.msra.mxu0 %v204
    %538 = vmatprep.subr.mxu0 0.0
    %539 = vmatpush1.msra.mxu0 %v205
    %540 = vmatprep.subr.mxu0 0.0
    %541 = vmatpush1.msra.mxu0 %v206
    %542 = vmatprep.subr.mxu0 0.0
    %543 = vmatpush1.msra.mxu0 %v207
    %544 = vmatprep.subr.mxu0 0.0
    %545 = vmatpush1.msra.mxu0 %v208
    %546 = vmatprep.subr.mxu0 0.0
    %547 = vmatpush1.msra.mxu0 %v209
    %548 = vmatprep.subr.mxu0 0.0
    %549 = vmatpush1.msra.mxu0 %v210
    %550 = vmatprep.subr.mxu0 0.0
    %551 = vmatpush1.msra.mxu0 %v211
    %552 = vmatprep.subr.mxu0 0.0
    %553 = vmatpush1.msra.mxu0 %v212
    %554 = vmatprep.subr.mxu0 0.0
    %555 = vmatpush1.msra.mxu0 %v213
    %556 = vmatprep.subr.mxu0 0.0
    %557 = vmatpush1.msra.mxu0 %v214
    %558 = vmatprep.subr.mxu0 0.0
    %559 = vmatpush1.msra.mxu0 %v215
    %560 = vmatprep.subr.mxu0 0.0
    %561 = vmatpush1.msra.mxu0 %v216
    %562 = vmatprep.subr.mxu0 0.0
    %563 = vmatpush1.msra.mxu0 %v217
    %564 = vmatprep.mubr.f32.mxu0 %v57
    %565 = vmatmul.mubr.f32.gmra.mrb[0].mxu0 %v56
    %v566 = vpop.f32.mrb[0].mxu0
    %v567 = vadd.f32 %v497, %v566
    %v568 = vpop.f32.mrb[0].mxu0
    %569 = vdwg.mxu0
    %570 = vst [vmem:[#allocation8] sm:$0xff] %v567
    %v571 = vld [vmem:[%s3] sm:$0xff]
    %v572 = vmax.f32 %v567, 0.0
    %v573 = vmul.f32 %v567, %v571
    %v574 = vsub.f32 %v572, %v573
    %v575 = vand.u32 2147483647, %v567
    %v576 = vsub.f32 0.0, %v575
    %v577 = vmul.f32 %v576, 1.442695
    %v578 = vpow.pop %v577
    %v579 = vadd.f32 %v578, 1.0
    %v580 = vlog2.pop %v579
    %v581 = vmul.f32 %v580, 0.6931472
    %v582 = vadd.f32 %v574, %v581
    %v583 = vlaneseq
    %v584 = vshrl.u32 %v583, 7
    %v585 = vlaneseq
    %v586 = vand.u32 %v585, 127
    %s587 = smul.u32 0, 8
    %v588 = vstv %s587
    %v589 = vadd.s32 %v588, %v584
    %v590 = vmul.u32 %v589, 128
    %v591 = vadd.s32 %v590, %v586
    %vm592 = vcmp.lt.s32.totalorder %v591, 1024
    %v593 = vsel %vm592, %v582, 0.0
    %v594 = vrot.slane %v593, 4
    %v595 = vadd.f32 %v593, %v594
    %v596 = vrot.slane %v595, 2
    %v597 = vadd.f32 %v595, %v596
    %v598 = vrot.slane %v597, 1
    %v599 = vadd.f32 %v597, %v598
    %600 = vst [vmem:[#allocation9] sm:$0x1] %v599
    // Predicated region
    $region26: #{tpu_custom_call.1} parent=1 // pred_check
      _
    $region27: #{tpu_custom_call.1} parent=1 // pred_check_branch
      %602 = sbr.rel (0) target = $region29
    $region28: #{tpu_custom_call.1} parent=1 // pred_region
      %s604 = ssub.s32 128, 128
      %605 = vsyncadd [#allocation5], %s604
      %s607 = sshll.u32 [#allocation8], 4
      %s608 = int_to_ptr.vmem [resolvable:$true] %s607
      %610 = dma.vmem_to_hbm [thread:$0]  %s608, 128, %s4, [#allocation5]
    $region29: #{tpu_custom_call.1} parent=1 // pred_fallthru
      _
    // Predicated region
    $region30: #{tpu_custom_call.1} parent=1 // pred_check
      _
    $region31: #{tpu_custom_call.1} parent=1 // pred_check_branch
      %612 = sbr.rel (0) target = $region33
    $region32: #{tpu_custom_call.1} parent=1 // pred_region
      %s614 = ssub.s32 16, 16
      %615 = vsyncadd [#allocation10], %s614
      %s617 = sshll.u32 [#allocation9], 4
      %s618 = int_to_ptr.vmem [resolvable:$true] %s617
      %620 = dma.vmem_to_hbm [thread:$0]  %s618, 16, %s5, [#allocation10]
    $region33: #{tpu_custom_call.1} parent=1 // pred_fallthru
      _
    // Predicated region
    $region34: #{tpu_custom_call.1} parent=1 // pred_check
      _
    $region35: #{tpu_custom_call.1} parent=1 // pred_check_branch
      %622 = sbr.rel (0) target = $region37
    $region36: #{tpu_custom_call.1} parent=1 // pred_region
      %623 = dma.done [#allocation5], 128
    $region37: #{tpu_custom_call.1} parent=1 // pred_fallthru
      _
    // Predicated region
    $region38: #{tpu_custom_call.1} parent=1 // pred_check
      _
    $region39: #{tpu_custom_call.1} parent=1 // pred_check_branch
      %625 = sbr.rel (0) target = $region41
    $region40: #{tpu_custom_call.1} parent=1 // pred_region
      %626 = dma.done [#allocation10], 16
    $region41: #{tpu_custom_call.1} parent=1 // pred_fallthru
      _
    %627 = vsyncpa [#allocation4], 1
    %628 = vsyncpa [#allocation7], 1
    %629 = vsyncpa [#allocation5], 1
    %630 = vsyncpa [#allocation10], 1

</llo_original>
